<compile_context>
chip_gen: v5e
topology: v5e:2x2
jax: 0.10.0
libtpu: 0.0.40
codegen_flags: <defaults>
</compile_context>

<pallas_src>
import jax
import jax.numpy as jnp
from jax.experimental import pallas as pl
from jax.experimental.pallas import tpu as pltpu


_LANE = 128  # TPU lane width


def _mlp_kernel(params_ref, x_ref, o_ref):
    # params_ref: SMEM (13,) f32, layout:
    #   [0:6]  w1 (in=2, out=3) row-major: w1[i, j] -> params[3*i + j]
    #   [6:9]  b1 (3,)
    #   [9:12] w2 (in=3, out=1): w2[k, 0]  -> params[9 + k]
    #   [12]   b2
    # x_ref: VMEM (2, TILE_B)  -- batch on the lane axis (lane-dense)
    # o_ref: VMEM (1, TILE_B)
    x = x_ref[...]
    x0 = x[0:1, :]
    x1 = x[1:2, :]

    # Linear(2,3) + ReLU as pure VPU FMAs (MXU would waste >99.9% of the array).
    h0 = jnp.maximum(x0 * params_ref[0] + x1 * params_ref[3] + params_ref[6], 0.0)
    h1 = jnp.maximum(x0 * params_ref[1] + x1 * params_ref[4] + params_ref[7], 0.0)
    h2 = jnp.maximum(x0 * params_ref[2] + x1 * params_ref[5] + params_ref[8], 0.0)

    # Linear(3,1)
    o_ref[...] = (
        h0 * params_ref[9] + h1 * params_ref[10] + h2 * params_ref[11] + params_ref[12]
    )


def model2_forward(x, w1, b1, w2, b2, *, tile_b=2048):
    """_Model2 forward: Linear(2,3) -> ReLU -> Linear(3,1).

    x: (B, 2) float32.
    w1: (2, 3), b1: (3,), w2: (3, 1), b2: (1,)  -- weights pre-transposed to
    (in, out), so y = x @ W + b matches PyTorch's nn.Linear (x @ W.T + b).
    Returns (B, 1) float32.
    """
    B = x.shape[0]

    # All 13 params in one small f32 vector -> single SMEM-resident input.
    params = jnp.concatenate(
        [w1.reshape(-1), b1.reshape(-1), w2.reshape(-1), b2.reshape(-1)]
    ).astype(jnp.float32)

    # Lane-dense layout: batch on the last (128-lane) axis, padded to the tile.
    b_min = pl.cdiv(B, _LANE) * _LANE
    tile = max(_LANE, min(tile_b, b_min))          # multiple of 128
    b_pad = pl.cdiv(B, tile) * tile
    grid = (b_pad // tile,)

    x_t = jnp.zeros((2, b_pad), jnp.float32).at[:, :B].set(x.astype(jnp.float32).T)

    out_t = pl.pallas_call(
        _mlp_kernel,
        out_shape=jax.ShapeDtypeStruct((1, b_pad), jnp.float32),
        grid=grid,
        in_specs=[
            pl.BlockSpec(memory_space=pltpu.MemorySpace.SMEM),  # params: resident, no tiling
            pl.BlockSpec((2, tile), lambda i: (0, i)),          # x tile, lane-dense
        ],
        out_specs=pl.BlockSpec((1, tile), lambda i: (0, i)),    # lane-dense output
        compiler_params=pltpu.CompilerParams(
            dimension_semantics=("parallel",),  # shard batch tiles across TCs on v7x
        ),
    )(params, x_t)

    return out_t[0, :B].reshape(B, 1)


def _ref_forward(x, w1, b1, w2, b2):
    h = jnp.maximum(x @ w1 + b1, 0.0)
    return h @ w2 + b2


if __name__ == "__main__":
    key = jax.random.PRNGKey(0)
    k_x, k_w1, k_b1, k_w2, k_b2, k_x2 = jax.random.split(key, 6)

    # PyTorch-Linear-style U(-1/sqrt(fan_in), 1/sqrt(fan_in)) init.
    bound1 = 1.0 / jnp.sqrt(2.0)
    w1 = jax.random.uniform(k_w1, (2, 3), minval=-bound1, maxval=bound1, dtype=jnp.float32)
    b1 = jax.random.uniform(k_b1, (3,), minval=-bound1, maxval=bound1, dtype=jnp.float32)
    bound2 = 1.0 / jnp.sqrt(3.0)
    w2 = jax.random.uniform(k_w2, (3, 1), minval=-bound2, maxval=bound2, dtype=jnp.float32)
    b2 = jax.random.uniform(k_b2, (1,), minval=-bound2, maxval=bound2, dtype=jnp.float32)

    # Small batch consistent with the module spec.
    B = 8
    x = jax.random.normal(k_x, (B, 2), dtype=jnp.float32)
    out = jax.block_until_ready(model2_forward(x, w1, b1, w2, b2))
    ref = _ref_forward(x, w1, b1, w2, b2)
    assert out.shape == (B, 1)
    assert jnp.allclose(out, ref, atol=1e-5, rtol=1e-5), "Pallas kernel mismatch vs reference"

    # Also exercise the multi-tile grid + padding path (grid=3, B not a lane multiple).
    B2 = 300
    x2 = jax.random.normal(k_x2, (B2, 2), dtype=jnp.float32)
    out2 = jax.block_until_ready(model2_forward(x2, w1, b1, w2, b2, tile_b=128))
    ref2 = _ref_forward(x2, w1, b1, w2, b2)
    assert out2.shape == (B2, 1)
    assert jnp.allclose(out2, ref2, atol=1e-5, rtol=1e-5), "Pallas kernel mismatch (tiled path)"

    print("KERNEL_OK")
</pallas_src>

<mosaic_0001>
module attributes {stable_mosaic.version = 11 : i64} {
  func.func @_mlp_kernel(%arg0: i32, %arg1: memref<13xf32, #tpu.memory_space<smem>>, %arg2: memref<2x128xf32, #tpu.memory_space<vmem>>, %arg3: memref<1x128xf32, #tpu.memory_space<vmem>>) attributes {dimension_semantics = [#tpu.dimension_semantics<parallel>], iteration_bounds = array<i64: 1>, scalar_prefetch = 0 : i64, scratch_operands = 0 : i64, tpu.core_type = #tpu.core_type<tc>, window_params = [{transform_indices = @transform_0, window_bounds = array<i64: 13>}, {transform_indices = @transform_1, window_bounds = array<i64: 2, 128>}, {transform_indices = @transform_2, window_bounds = array<i64: 1, 128>}]} {
    %c0 = arith.constant 0 : index
    %c0_0 = arith.constant 0 : index
    %0 = vector.load %arg2[%c0, %c0_0] : memref<2x128xf32, #tpu.memory_space<vmem>>, vector<2x128xf32>
    %1 = vector.extract_strided_slice %0 {offsets = [0, 0], sizes = [1, 128], strides = [1, 1]} : vector<2x128xf32> to vector<1x128xf32>
    %2 = vector.extract_strided_slice %0 {offsets = [1, 0], sizes = [1, 128], strides = [1, 1]} : vector<2x128xf32> to vector<1x128xf32>
    %c0_1 = arith.constant 0 : index
    %3 = memref.load %arg1[%c0_1] : memref<13xf32, #tpu.memory_space<smem>>
    %4 = vector.broadcast %3 : f32 to vector<1x128xf32>
    %5 = arith.mulf %1, %4 : vector<1x128xf32>
    %c3 = arith.constant 3 : index
    %6 = memref.load %arg1[%c3] : memref<13xf32, #tpu.memory_space<smem>>
    %7 = vector.broadcast %6 : f32 to vector<1x128xf32>
    %8 = arith.mulf %2, %7 : vector<1x128xf32>
    %9 = arith.addf %5, %8 : vector<1x128xf32>
    %c6 = arith.constant 6 : index
    %10 = memref.load %arg1[%c6] : memref<13xf32, #tpu.memory_space<smem>>
    %11 = vector.broadcast %10 : f32 to vector<1x128xf32>
    %12 = arith.addf %9, %11 : vector<1x128xf32>
    %cst = arith.constant 0.000000e+00 : f32
    %13 = vector.broadcast %cst : f32 to vector<1x128xf32>
    %14 = arith.maximumf %12, %13 : vector<1x128xf32>
    %c1 = arith.constant 1 : index
    %15 = memref.load %arg1[%c1] : memref<13xf32, #tpu.memory_space<smem>>
    %16 = vector.broadcast %15 : f32 to vector<1x128xf32>
    %17 = arith.mulf %1, %16 : vector<1x128xf32>
    %c4 = arith.constant 4 : index
    %18 = memref.load %arg1[%c4] : memref<13xf32, #tpu.memory_space<smem>>
    %19 = vector.broadcast %18 : f32 to vector<1x128xf32>
    %20 = arith.mulf %2, %19 : vector<1x128xf32>
    %21 = arith.addf %17, %20 : vector<1x128xf32>
    %c7 = arith.constant 7 : index
    %22 = memref.load %arg1[%c7] : memref<13xf32, #tpu.memory_space<smem>>
    %23 = vector.broadcast %22 : f32 to vector<1x128xf32>
    %24 = arith.addf %21, %23 : vector<1x128xf32>
    %cst_2 = arith.constant 0.000000e+00 : f32
    %25 = vector.broadcast %cst_2 : f32 to vector<1x128xf32>
    %26 = arith.maximumf %24, %25 : vector<1x128xf32>
    %c2 = arith.constant 2 : index
    %27 = memref.load %arg1[%c2] : memref<13xf32, #tpu.memory_space<smem>>
    %28 = vector.broadcast %27 : f32 to vector<1x128xf32>
    %29 = arith.mulf %1, %28 : vector<1x128xf32>
    %c5 = arith.constant 5 : index
    %30 = memref.load %arg1[%c5] : memref<13xf32, #tpu.memory_space<smem>>
    %31 = vector.broadcast %30 : f32 to vector<1x128xf32>
    %32 = arith.mulf %2, %31 : vector<1x128xf32>
    %33 = arith.addf %29, %32 : vector<1x128xf32>
    %c8 = arith.constant 8 : index
    %34 = memref.load %arg1[%c8] : memref<13xf32, #tpu.memory_space<smem>>
    %35 = vector.broadcast %34 : f32 to vector<1x128xf32>
    %36 = arith.addf %33, %35 : vector<1x128xf32>
    %cst_3 = arith.constant 0.000000e+00 : f32
    %37 = vector.broadcast %cst_3 : f32 to vector<1x128xf32>
    %38 = arith.maximumf %36, %37 : vector<1x128xf32>
    %c9 = arith.constant 9 : index
    %39 = memref.load %arg1[%c9] : memref<13xf32, #tpu.memory_space<smem>>
    %40 = vector.broadcast %39 : f32 to vector<1x128xf32>
    %41 = arith.mulf %14, %40 : vector<1x128xf32>
    %c10 = arith.constant 10 : index
    %42 = memref.load %arg1[%c10] : memref<13xf32, #tpu.memory_space<smem>>
    %43 = vector.broadcast %42 : f32 to vector<1x128xf32>
    %44 = arith.mulf %26, %43 : vector<1x128xf32>
    %45 = arith.addf %41, %44 : vector<1x128xf32>
    %c11 = arith.constant 11 : index
    %46 = memref.load %arg1[%c11] : memref<13xf32, #tpu.memory_space<smem>>
    %47 = vector.broadcast %46 : f32 to vector<1x128xf32>
    %48 = arith.mulf %38, %47 : vector<1x128xf32>
    %49 = arith.addf %45, %48 : vector<1x128xf32>
    %c12 = arith.constant 12 : index
    %50 = memref.load %arg1[%c12] : memref<13xf32, #tpu.memory_space<smem>>
    %51 = vector.broadcast %50 : f32 to vector<1x128xf32>
    %52 = arith.addf %49, %51 : vector<1x128xf32>
    %c0_4 = arith.constant 0 : index
    %c0_5 = arith.constant 0 : index
    %53 = vector.load %arg3[%c0_4, %c0_5] : memref<1x128xf32, #tpu.memory_space<vmem>>, vector<1x128xf32>
    tpu.vector_store %arg3[%c0_4, %c0_5], %52 {strides = array<i32>} : memref<1x128xf32, #tpu.memory_space<vmem>>, vector<1x128xf32>,
    return
  }
  func.func @transform_0(%arg0: i32) -> i32 {
    %c0_i32 = arith.constant 0 : i32
    %c0_i32_0 = arith.constant 0 : i32
    return %c0_i32 : i32
  }
  func.func @transform_1(%arg0: i32) -> (i32, i32) {
    %c0_i32 = arith.constant 0 : i32
    %c0_i32_0 = arith.constant 0 : i32
    return %c0_i32, %arg0 : i32, i32
  }
  func.func @transform_2(%arg0: i32) -> (i32, i32) {
    %c0_i32 = arith.constant 0 : i32
    %c0_i32_0 = arith.constant 0 : i32
    return %c0_i32, %arg0 : i32, i32
  }
}

</mosaic_0001>

<llo_original>
// kernel: tpu_custom_call.1
$region0: #{tpu_custom_call.1}
  #allocation0 [shape = 'u32[]', space=smem, size = 0x4, offset = 0x4, fixed_abs, tag = 'smem constant byte address 0x4 - core index']
  #allocation1 [shape = 'u32[72,128]{1,0:T(1,128)}', space=vmem, size = 0x9000, scoped, tag = 'internal scratch']
  %s0 = inlined_call_operand.hbm [shape: f32[13], index: 0, kind: input, shape index: {}]
  %s1 = inlined_call_operand.hbm [shape: f32[2,128], index: 1, kind: input, shape index: {}]
  %s2 = inlined_call_operand.hbm [shape: f32[1,128], index: 2, kind: output, shape index: {}]
  %s3 = sld [smem:[#allocation0]]
  $region26: #{tpu_custom_call.1} parent=0
    _
  %s5 = ssub.s32 1, %s3
  %s6 = scalar_select 0, %s5, %s3
  $region1: #{tpu_custom_call.1} parent=0
    #allocation2 [shape = 'u8[512]{0}', space=smem, size = 0x200, scoped, tag = 'input window, operand 0, single buffered']
    #allocation3 [shape = 's32[1]{0}', space=sflag, size = 0x4, scoped, tag = 'scoped memory for tpu_custom_call.1']
    #allocation4 [shape = 's32[1]{0}', space=sflag, size = 0x4, scoped, tag = 'scoped memory for tpu_custom_call.1']
    #allocation5 [shape = 's32[1]{0}', space=sflag, size = 0x4, scoped, tag = 'scoped memory for tpu_custom_call.1']
    #allocation6 [shape = 'u8[1024]{0}', space=vmem, size = 0x400, scoped, tag = 'input window, operand 1, single buffered']
    #allocation7 [shape = 'u8[512]{0}', space=vmem, size = 0x400, scoped, tag = 'output window, operand 0, single buffered']
    %7 = vsyncpa [#allocation5], 0
    %8 = vsyncpa [#allocation3], 0
    %9 = vsyncpa [#allocation4], 0
    // Predicated region
    $region2: #{tpu_custom_call.1} parent=1 // pred_check
      _
    $region3: #{tpu_custom_call.1} parent=1 // pred_check_branch
      %11 = sbr.rel (0) target = $region5
    $region4: #{tpu_custom_call.1} parent=1 // pred_region
      %13 = vsyncadd [#allocation5], 0
      %s15 = sshll.u32 %s0, 4
      %s16 = int_to_ptr.hbm [resolvable:$true] %s15
      %18 = dma.hbm_to_smem %s16, 16, [#allocation2], [#allocation5]
    $region5: #{tpu_custom_call.1} parent=1 // pred_fallthru
      _
    // Predicated region
    $region6: #{tpu_custom_call.1} parent=1 // pred_check
      _
    $region7: #{tpu_custom_call.1} parent=1 // pred_check_branch
      %20 = sbr.rel (0) target = $region9
    $region8: #{tpu_custom_call.1} parent=1 // pred_region
      %22 = vsyncadd [#allocation3], 0
      %s24 = sshll.u32 %s1, 4
      %s25 = int_to_ptr.hbm [resolvable:$true] %s24
      %s26 = sshll.u32 [#allocation6], 4
      %s27 = int_to_ptr.vmem [resolvable:$true] %s26
      %29 = dma.hbm_to_vmem [thread:$0]  %s25, 32, %s27, [#allocation3]
    $region9: #{tpu_custom_call.1} parent=1 // pred_fallthru
      _
    // Predicated region
    $region10: #{tpu_custom_call.1} parent=1 // pred_check
      _
    $region11: #{tpu_custom_call.1} parent=1 // pred_check_branch
      %31 = sbr.rel (0) target = $region13
    $region12: #{tpu_custom_call.1} parent=1 // pred_region
      %33 = dma.done [#allocation5], 16
    $region13: #{tpu_custom_call.1} parent=1 // pred_fallthru
      _
    // Predicated region
    $region14: #{tpu_custom_call.1} parent=1 // pred_check
      _
    $region15: #{tpu_custom_call.1} parent=1 // pred_check_branch
      %35 = sbr.rel (0) target = $region17
    $region16: #{tpu_custom_call.1} parent=1 // pred_region
      %37 = dma.done [#allocation3], 32
    $region17: #{tpu_custom_call.1} parent=1 // pred_fallthru
      _
    %38 = sfence
    %v39 = vld [vmem:[#allocation6] sm:$0x3]
    %s40 = sld [smem:[#allocation2]]
    %v41 = vstv %s40
    %v42 = vmul.f32 %v39, %v41
    %s43 = sld [smem:[#allocation2 + $0x3]]
    %v44 = vstv %s43
    %v45 = vmul.f32 %v39, %v44
    %v47 = vrot.slane %v45, 1
    %v49 = vadd.f32 %v42, %v47
    %s50 = sld [smem:[#allocation2 + $0x6]]
    %v51 = vstv %s50
    %v52 = vadd.f32 %v49, %v51
    %v53 = vmax.f32 %v52, 0.0
    %s54 = sld [smem:[#allocation2 + $0x1]]
    %v55 = vstv %s54
    %v56 = vmul.f32 %v39, %v55
    %s57 = sld [smem:[#allocation2 + $0x4]]
    %v58 = vstv %s57
    %v59 = vmul.f32 %v39, %v58
    %v61 = vrot.slane %v59, 1
    %v63 = vadd.f32 %v56, %v61
    %s64 = sld [smem:[#allocation2 + $0x7]]
    %v65 = vstv %s64
    %v66 = vadd.f32 %v63, %v65
    %v67 = vmax.f32 %v66, 0.0
    %s68 = sld [smem:[#allocation2 + $0x2]]
    %v69 = vstv %s68
    %v70 = vmul.f32 %v39, %v69
    %s71 = sld [smem:[#allocation2 + $0x5]]
    %v72 = vstv %s71
    %v73 = vmul.f32 %v39, %v72
    %v75 = vrot.slane %v73, 1
    %v77 = vadd.f32 %v70, %v75
    %s78 = sld [smem:[#allocation2 + $0x8]]
    %v79 = vstv %s78
    %v80 = vadd.f32 %v77, %v79
    %v81 = vmax.f32 %v80, 0.0
    %s82 = sld [smem:[#allocation2 + $0x9]]
    %v83 = vstv %s82
    %v84 = vmul.f32 %v53, %v83
    %s85 = sld [smem:[#allocation2 + $0xa]]
    %v86 = vstv %s85
    %v87 = vmul.f32 %v67, %v86
    %v88 = vadd.f32 %v84, %v87
    %s89 = sld [smem:[#allocation2 + $0xb]]
    %v90 = vstv %s89
    %v91 = vmul.f32 %v81, %v90
    %v92 = vadd.f32 %v88, %v91
    %s93 = sld [smem:[#allocation2 + $0xc]]
    %v94 = vstv %s93
    %v95 = vadd.f32 %v92, %v94
    %96 = vst [vmem:[#allocation7] sm:$0x1] %v95
    // Predicated region
    $region18: #{tpu_custom_call.1} parent=1 // pred_check
      _
    $region19: #{tpu_custom_call.1} parent=1 // pred_check_branch
      %98 = sbr.rel (0) target = $region21
    $region20: #{tpu_custom_call.1} parent=1 // pred_region
      %100 = vsyncadd [#allocation4], 0
      %s102 = sshll.u32 [#allocation7], 4
      %s103 = int_to_ptr.vmem [resolvable:$true] %s102
      %s104 = sshll.u32 %s2, 4
      %s105 = int_to_ptr.hbm [resolvable:$true] %s104
      %107 = dma.vmem_to_hbm [thread:$0]  %s103, 16, %s105, [#allocation4]
    $region21: #{tpu_custom_call.1} parent=1 // pred_fallthru
      _
    // Predicated region
    $region22: #{tpu_custom_call.1} parent=1 // pred_check
      _
    $region23: #{tpu_custom_call.1} parent=1 // pred_check_branch
      %109 = sbr.rel (0) target = $region25
    $region24: #{tpu_custom_call.1} parent=1 // pred_region
      %111 = dma.done [#allocation4], 16
    $region25: #{tpu_custom_call.1} parent=1 // pred_fallthru
      _
    %112 = vsyncpa [#allocation3], 1
    %113 = vsyncpa [#allocation4], 1
    %114 = vsyncpa [#allocation5], 1

</llo_original>
